<compile_context>
chip_gen: v5e
topology: v5e:2x2
jax: 0.10.0
libtpu: 0.0.40
codegen_flags: <defaults>
</compile_context>

<pallas_src>
import functools

import jax
import jax.numpy as jnp
from jax.experimental import pallas as pl
from jax.experimental.pallas import tpu as pltpu


# ---------------------------------------------------------------------------
# Shared per-layer cell math (traced inline, all operands already in VMEM).
# ---------------------------------------------------------------------------
def _cell(x, h, c, w_ref, b, in_dim, H):
    """One LSTMCell: gates = x@W[:in_dim] + h@W[in_dim:] + b ; returns (h', c')."""
    gates = (jnp.dot(x, w_ref[:in_dim, :], preferred_element_type=jnp.float32)
             + jnp.dot(h, w_ref[in_dim:, :], preferred_element_type=jnp.float32)
             + b)
    s = jax.nn.sigmoid(gates)                         # one full-width EUP pass
    i = s[:, 0 * H:1 * H]
    f = s[:, 1 * H:2 * H]
    o = s[:, 3 * H:4 * H]
    g = jnp.tanh(gates[:, 2 * H:3 * H])               # tanh only on g quarter
    c_new = f * c + i * g
    h_new = o * jnp.tanh(c_new)
    return h_new, c_new


# ---------------------------------------------------------------------------
# Single-step kernel (matches the PyTorch module's forward exactly).
# ---------------------------------------------------------------------------
def _lstm2_step_kernel(x_ref, h0_ref, c0_ref, h1_ref, c1_ref,
                       w1_ref, w2_ref, b_ref,
                       ho_ref, co_ref, h1o_ref, c1o_ref, *, I, H1, H2):
    b1 = b_ref[:, :4 * H1]
    b2 = b_ref[:, 4 * H1:4 * (H1 + H2)]

    h_l1, c_l1 = _cell(x_ref[...], h0_ref[...], c0_ref[...], w1_ref, b1, I, H1)
    h_out, c_out = _cell(h_l1, h1_ref[...], c1_ref[...], w2_ref, b2, H1, H2)

    ho_ref[...] = h_out
    co_ref[...] = c_out
    h1o_ref[...] = h_l1
    c1o_ref[...] = c_l1


# ---------------------------------------------------------------------------
# Sequence-fused kernel: grid over T, weights VMEM-resident, state in scratch.
# ---------------------------------------------------------------------------
def _lstm2_seq_kernel(x_ref, h0_ref, c0_ref, h1_ref, c1_ref,
                      w1_ref, w2_ref, b_ref,
                      hseq_ref, ho_ref, co_ref, h1o_ref, c1o_ref,
                      h1_s, c1_s, h2_s, c2_s, *, I, H1, H2):
    t = pl.program_id(0)

    @pl.when(t == 0)
    def _():
        h1_s[...] = h0_ref[...]
        c1_s[...] = c0_ref[...]
        h2_s[...] = h1_ref[...]
        c2_s[...] = c1_ref[...]

    b1 = b_ref[:, :4 * H1]
    b2 = b_ref[:, 4 * H1:4 * (H1 + H2)]

    x = x_ref[0]                                      # (B, I) for this timestep
    h_l1, c_l1 = _cell(x, h1_s[...], c1_s[...], w1_ref, b1, I, H1)
    h_out, c_out = _cell(h_l1, h2_s[...], c2_s[...], w2_ref, b2, H1, H2)

    # Carry state across grid steps in VMEM scratch (never touches HBM).
    h1_s[...] = h_l1
    c1_s[...] = c_l1
    h2_s[...] = h_out
    c2_s[...] = c_out

    hseq_ref[0] = h_out                               # per-step output

    @pl.when(t == pl.num_programs(0) - 1)
    def _():
        ho_ref[...] = h_out
        co_ref[...] = c_out
        h1o_ref[...] = h_l1
        c1o_ref[...] = c_l1


# ---------------------------------------------------------------------------
# One-time parameter prep (hoisted out of the forward path).
# ---------------------------------------------------------------------------
def prepare_params(params):
    """Stack [W_ih^T ; W_hh^T] per layer and merge all folded biases into one row."""
    w1 = jnp.concatenate(
        [jnp.transpose(params["l1_w_ih"]), jnp.transpose(params["l1_w_hh"])],
        axis=0)                                                   # (I+H1, 4H1)
    w2 = jnp.concatenate(
        [jnp.transpose(params["l2_w_ih"]), jnp.transpose(params["l2_w_hh"])],
        axis=0)                                                   # (H1+H2, 4H2)
    b = jnp.concatenate(
        [params["l1_b_ih"] + params["l1_b_hh"],
         params["l2_b_ih"] + params["l2_b_hh"]], axis=0).reshape(1, -1)  # (1, 4H1+4H2)
    return {"w1": w1, "w2": w2, "b": b}


# ---------------------------------------------------------------------------
# Wrappers
# ---------------------------------------------------------------------------
def wifi_full_lstm_cells_2lay(prep, x_in, h0, c0, h1, c1):
    """Single-step forward, identical semantics to the PyTorch module.

    Returns ((hid_out, c_out), (hid_lay1, c_lay1)).
    """
    B, I = x_in.shape
    H1 = c0.shape[1]
    H2 = c1.shape[1]

    vmem = pl.BlockSpec(memory_space=pltpu.MemorySpace.VMEM)
    h_out, c_out, h_l1, c_l1 = pl.pallas_call(
        functools.partial(_lstm2_step_kernel, I=I, H1=H1, H2=H2),
        out_shape=(jax.ShapeDtypeStruct((B, H2), jnp.float32),
                   jax.ShapeDtypeStruct((B, H2), jnp.float32),
                   jax.ShapeDtypeStruct((B, H1), jnp.float32),
                   jax.ShapeDtypeStruct((B, H1), jnp.float32)),
        in_specs=[vmem] * 8,
        out_specs=(vmem, vmem, vmem, vmem),
    )(x_in, h0, c0, h1, c1, prep["w1"], prep["w2"], prep["b"])
    return (h_out, c_out), (h_l1, c_l1)


def wifi_lstm2_sequence(prep, x_seq, h0, c0, h1, c1):
    """Run the 2-layer cell over a whole sequence inside ONE pallas_call.

    x_seq: (T, B, I).  Returns (h_out_seq, (h_out, c_out), (h_lay1, c_lay1)).
    """
    T, B, I = x_seq.shape
    H1 = c0.shape[1]
    H2 = c1.shape[1]

    const2 = lambda t: (0, 0)
    grid_spec = pltpu.PrefetchScalarGridSpec(
        num_scalar_prefetch=0,
        grid=(T,),
        in_specs=[
            pl.BlockSpec((1, B, I), lambda t: (t, 0, 0)),         # x_t
            pl.BlockSpec((B, H1), const2),                        # h0 (init only)
            pl.BlockSpec((B, H1), const2),                        # c0
            pl.BlockSpec((B, H2), const2),                        # h1
            pl.BlockSpec((B, H2), const2),                        # c1
            pl.BlockSpec((I + H1, 4 * H1), const2),               # w1 (resident)
            pl.BlockSpec((H1 + H2, 4 * H2), const2),              # w2 (resident)
            pl.BlockSpec((1, 4 * (H1 + H2)), const2),             # merged bias
        ],
        out_specs=[
            pl.BlockSpec((1, B, H2), lambda t: (t, 0, 0)),        # h_out per step
            pl.BlockSpec((B, H2), const2),                        # final h_out
            pl.BlockSpec((B, H2), const2),                        # final c_out
            pl.BlockSpec((B, H1), const2),                        # final h_lay1
            pl.BlockSpec((B, H1), const2),                        # final c_lay1
        ],
        scratch_shapes=[
            pltpu.VMEM((B, H1), jnp.float32),                     # h layer1 carry
            pltpu.VMEM((B, H1), jnp.float32),                     # c layer1 carry
            pltpu.VMEM((B, H2), jnp.float32),                     # h layer2 carry
            pltpu.VMEM((B, H2), jnp.float32),                     # c layer2 carry
        ],
    )
    h_seq, h_out, c_out, h_l1, c_l1 = pl.pallas_call(
        functools.partial(_lstm2_seq_kernel, I=I, H1=H1, H2=H2),
        out_shape=(jax.ShapeDtypeStruct((T, B, H2), jnp.float32),
                   jax.ShapeDtypeStruct((B, H2), jnp.float32),
                   jax.ShapeDtypeStruct((B, H2), jnp.float32),
                   jax.ShapeDtypeStruct((B, H1), jnp.float32),
                   jax.ShapeDtypeStruct((B, H1), jnp.float32)),
        grid_spec=grid_spec,
        compiler_params=pltpu.CompilerParams(
            dimension_semantics=("arbitrary",)),                  # sequential carry
    )(x_seq, h0, c0, h1, c1, prep["w1"], prep["w2"], prep["b"])
    return h_seq, (h_out, c_out), (h_l1, c_l1)


# ---------------------------------------------------------------------------
# Init + pure-JAX reference
# ---------------------------------------------------------------------------
def init_params(key, input_size, hidden_size, num_classes):
    """Deterministic init mirroring PyTorch's U(-1/sqrt(H), 1/sqrt(H))."""
    def uni(k, shape, fan):
        bound = 1.0 / jnp.sqrt(jnp.asarray(fan, jnp.float32))
        return jax.random.uniform(k, shape, jnp.float32, -bound, bound)

    ks = jax.random.split(key, 8)
    return {
        "l1_w_ih": uni(ks[0], (4 * hidden_size, input_size), hidden_size),
        "l1_w_hh": uni(ks[1], (4 * hidden_size, hidden_size), hidden_size),
        "l1_b_ih": uni(ks[2], (4 * hidden_size,), hidden_size),
        "l1_b_hh": uni(ks[3], (4 * hidden_size,), hidden_size),
        "l2_w_ih": uni(ks[4], (4 * num_classes, hidden_size), num_classes),
        "l2_w_hh": uni(ks[5], (4 * num_classes, num_classes), num_classes),
        "l2_b_ih": uni(ks[6], (4 * num_classes,), num_classes),
        "l2_b_hh": uni(ks[7], (4 * num_classes,), num_classes),
    }


def _reference_lstm_cell(x, h, c, w_ih, w_hh, b_ih, b_hh):
    gates = x @ w_ih.T + b_ih + h @ w_hh.T + b_hh
    H = h.shape[1]
    i = jax.nn.sigmoid(gates[:, 0 * H:1 * H])
    f = jax.nn.sigmoid(gates[:, 1 * H:2 * H])
    g = jnp.tanh(gates[:, 2 * H:3 * H])
    o = jax.nn.sigmoid(gates[:, 3 * H:4 * H])
    c_new = f * c + i * g
    h_new = o * jnp.tanh(c_new)
    return h_new, c_new


def _reference_step(params, x, h0, c0, h1, c1):
    rh1, rc1 = _reference_lstm_cell(
        x, h0, c0,
        params["l1_w_ih"], params["l1_w_hh"], params["l1_b_ih"], params["l1_b_hh"])
    rho, rco = _reference_lstm_cell(
        rh1, h1, c1,
        params["l2_w_ih"], params["l2_w_hh"], params["l2_b_ih"], params["l2_b_hh"])
    return (rho, rco), (rh1, rc1)


if __name__ == "__main__":
    input_size, hidden_size, num_classes = 16, 32, 8
    batch, seq_len = 8, 6

    key = jax.random.PRNGKey(0)
    kp, kx, kh0, kc0, kh1, kc1, kxs = jax.random.split(key, 7)

    params = init_params(kp, input_size, hidden_size, num_classes)
    prep = prepare_params(params)       # one-time weight stacking / bias folding

    x_in = jax.random.normal(kx, (batch, input_size), jnp.float32)
    h0 = jax.random.normal(kh0, (batch, hidden_size), jnp.float32)
    c0 = jax.random.normal(kc0, (batch, hidden_size), jnp.float32)
    h1 = jax.random.normal(kh1, (batch, num_classes), jnp.float32)
    c1 = jax.random.normal(kc1, (batch, num_classes), jnp.float32)
    x_seq = jax.random.normal(kxs, (seq_len, batch, input_size), jnp.float32)

    # --- single step (module forward) ---
    (hid_out, c_out), (hid_lay1, c_lay1) = wifi_full_lstm_cells_2lay(
        prep, x_in, h0, c0, h1, c1)
    jax.block_until_ready((hid_out, c_out, hid_lay1, c_lay1))

    (ref_ho, ref_co), (ref_h1, ref_c1) = _reference_step(params, x_in, h0, c0, h1, c1)
    assert jnp.allclose(hid_lay1, ref_h1, atol=1e-5)
    assert jnp.allclose(c_lay1, ref_c1, atol=1e-5)
    assert jnp.allclose(hid_out, ref_ho, atol=1e-5)
    assert jnp.allclose(c_out, ref_co, atol=1e-5)

    # --- fused sequence (one pallas_call for all T timesteps) ---
    h_seq, (s_ho, s_co), (s_h1, s_c1) = wifi_lstm2_sequence(
        prep, x_seq, h0, c0, h1, c1)
    jax.block_until_ready((h_seq, s_ho, s_co, s_h1, s_c1))

    rh0, rc0, rh1s, rc1s = h0, c0, h1, c1
    ref_seq = []
    for t in range(seq_len):
        (rh1s_new, rc1s_new), (rh0, rc0) = _reference_step(
            params, x_seq[t], rh0, rc0, rh1s, rc1s)
        rh1s, rc1s = rh1s_new, rc1s_new
        ref_seq.append(rh1s)
    ref_seq = jnp.stack(ref_seq, axis=0)

    assert jnp.allclose(h_seq, ref_seq, atol=1e-5)
    assert jnp.allclose(s_ho, rh1s, atol=1e-5)
    assert jnp.allclose(s_co, rc1s, atol=1e-5)
    assert jnp.allclose(s_h1, rh0, atol=1e-5)
    assert jnp.allclose(s_c1, rc0, atol=1e-5)

    print("KERNEL_OK")
</pallas_src>

<mosaic_0001>
module attributes {stable_mosaic.version = 11 : i64} {
  func.func @_lstm2_step_kernel(%arg0: memref<8x16xf32, #tpu.memory_space<vmem>>, %arg1: memref<8x32xf32, #tpu.memory_space<vmem>>, %arg2: memref<8x32xf32, #tpu.memory_space<vmem>>, %arg3: memref<8x8xf32, #tpu.memory_space<vmem>>, %arg4: memref<8x8xf32, #tpu.memory_space<vmem>>, %arg5: memref<48x128xf32, #tpu.memory_space<vmem>>, %arg6: memref<40x32xf32, #tpu.memory_space<vmem>>, %arg7: memref<1x160xf32, #tpu.memory_space<vmem>>, %arg8: memref<8x8xf32, #tpu.memory_space<vmem>>, %arg9: memref<8x8xf32, #tpu.memory_space<vmem>>, %arg10: memref<8x32xf32, #tpu.memory_space<vmem>>, %arg11: memref<8x32xf32, #tpu.memory_space<vmem>>) attributes {dimension_semantics = [], scalar_prefetch = 0 : i64, scratch_operands = 0 : i64, tpu.core_type = #tpu.core_type<tc>} {
    %c0 = arith.constant 0 : index
    %c0_0 = arith.constant 0 : index
    %0 = vector.load %arg7[%c0, %c0_0] : memref<1x160xf32, #tpu.memory_space<vmem>>, vector<1x128xf32>
    %c0_1 = arith.constant 0 : index
    %c128 = arith.constant 128 : index
    %1 = vector.load %arg7[%c0_1, %c128] : memref<1x160xf32, #tpu.memory_space<vmem>>, vector<1x32xf32>
    %c0_2 = arith.constant 0 : index
    %c0_3 = arith.constant 0 : index
    %2 = vector.load %arg0[%c0_2, %c0_3] : memref<8x16xf32, #tpu.memory_space<vmem>>, vector<8x16xf32>
    %c0_4 = arith.constant 0 : index
    %c0_5 = arith.constant 0 : index
    %3 = vector.load %arg1[%c0_4, %c0_5] : memref<8x32xf32, #tpu.memory_space<vmem>>, vector<8x32xf32>
    %c0_6 = arith.constant 0 : index
    %c0_7 = arith.constant 0 : index
    %4 = vector.load %arg2[%c0_6, %c0_7] : memref<8x32xf32, #tpu.memory_space<vmem>>, vector<8x32xf32>
    %c0_8 = arith.constant 0 : index
    %c0_9 = arith.constant 0 : index
    %5 = vector.load %arg5[%c0_8, %c0_9] : memref<48x128xf32, #tpu.memory_space<vmem>>, vector<16x128xf32>
    %cst = arith.constant dense<0.000000e+00> : vector<8x128xf32>
    %6 = tpu.matmul %2, %5, %cst {dimension_numbers = #tpu.dot_dimension_numbers<[1], [0], [0], [1], [0, 0, 1, 1], [], []>} : vector<8x16xf32>, vector<16x128xf32>, vector<8x128xf32> -> vector<8x128xf32>
    %c16 = arith.constant 16 : index
    %c0_10 = arith.constant 0 : index
    %7 = vector.load %arg5[%c16, %c0_10] : memref<48x128xf32, #tpu.memory_space<vmem>>, vector<32x128xf32>
    %cst_11 = arith.constant dense<0.000000e+00> : vector<8x128xf32>
    %8 = tpu.matmul %3, %7, %cst_11 {dimension_numbers = #tpu.dot_dimension_numbers<[1], [0], [0], [1], [0, 0, 1, 1], [], []>} : vector<8x32xf32>, vector<32x128xf32>, vector<8x128xf32> -> vector<8x128xf32>
    %9 = arith.addf %6, %8 : vector<8x128xf32>
    %10 = vector.broadcast %0 : vector<1x128xf32> to vector<8x128xf32>
    %11 = arith.addf %9, %10 : vector<8x128xf32>
    %12 = arith.negf %11 : vector<8x128xf32>
    %13 = math.exp %12 : vector<8x128xf32>
    %cst_12 = arith.constant 1.000000e+00 : f32
    %14 = vector.broadcast %cst_12 : f32 to vector<8x128xf32>
    %15 = arith.addf %14, %13 : vector<8x128xf32>
    %16 = arith.divf %14, %15 : vector<8x128xf32>
    %17 = vector.extract_strided_slice %16 {offsets = [0, 0], sizes = [8, 32], strides = [1, 1]} : vector<8x128xf32> to vector<8x32xf32>
    %18 = vector.extract_strided_slice %16 {offsets = [0, 32], sizes = [8, 32], strides = [1, 1]} : vector<8x128xf32> to vector<8x32xf32>
    %19 = vector.extract_strided_slice %16 {offsets = [0, 96], sizes = [8, 32], strides = [1, 1]} : vector<8x128xf32> to vector<8x32xf32>
    %20 = vector.extract_strided_slice %11 {offsets = [0, 64], sizes = [8, 32], strides = [1, 1]} : vector<8x128xf32> to vector<8x32xf32>
    %21 = math.tanh %20 : vector<8x32xf32>
    %22 = arith.mulf %18, %4 : vector<8x32xf32>
    %23 = arith.mulf %17, %21 : vector<8x32xf32>
    %24 = arith.addf %22, %23 : vector<8x32xf32>
    %25 = math.tanh %24 : vector<8x32xf32>
    %26 = arith.mulf %19, %25 : vector<8x32xf32>
    %c0_13 = arith.constant 0 : index
    %c0_14 = arith.constant 0 : index
    %27 = vector.load %arg3[%c0_13, %c0_14] : memref<8x8xf32, #tpu.memory_space<vmem>>, vector<8x8xf32>
    %c0_15 = arith.constant 0 : index
    %c0_16 = arith.constant 0 : index
    %28 = vector.load %arg4[%c0_15, %c0_16] : memref<8x8xf32, #tpu.memory_space<vmem>>, vector<8x8xf32>
    %c0_17 = arith.constant 0 : index
    %c0_18 = arith.constant 0 : index
    %29 = vector.load %arg6[%c0_17, %c0_18] : memref<40x32xf32, #tpu.memory_space<vmem>>, vector<32x32xf32>
    %cst_19 = arith.constant dense<0.000000e+00> : vector<8x32xf32>
    %30 = tpu.matmul %26, %29, %cst_19 {dimension_numbers = #tpu.dot_dimension_numbers<[1], [0], [0], [1], [0, 0, 1, 1], [], []>} : vector<8x32xf32>, vector<32x32xf32>, vector<8x32xf32> -> vector<8x32xf32>
    %c32 = arith.constant 32 : index
    %c0_20 = arith.constant 0 : index
    %31 = vector.load %arg6[%c32, %c0_20] : memref<40x32xf32, #tpu.memory_space<vmem>>, vector<8x32xf32>
    %cst_21 = arith.constant dense<0.000000e+00> : vector<8x32xf32>
    %32 = tpu.matmul %27, %31, %cst_21 {dimension_numbers = #tpu.dot_dimension_numbers<[1], [0], [0], [1], [0, 0, 1, 1], [], []>} : vector<8x8xf32>, vector<8x32xf32>, vector<8x32xf32> -> vector<8x32xf32>
    %33 = arith.addf %30, %32 : vector<8x32xf32>
    %34 = vector.broadcast %1 : vector<1x32xf32> to vector<8x32xf32>
    %35 = arith.addf %33, %34 : vector<8x32xf32>
    %36 = arith.negf %35 : vector<8x32xf32>
    %37 = math.exp %36 : vector<8x32xf32>
    %cst_22 = arith.constant 1.000000e+00 : f32
    %38 = vector.broadcast %cst_22 : f32 to vector<8x32xf32>
    %39 = arith.addf %38, %37 : vector<8x32xf32>
    %40 = arith.divf %38, %39 : vector<8x32xf32>
    %41 = vector.extract_strided_slice %40 {offsets = [0, 0], sizes = [8, 8], strides = [1, 1]} : vector<8x32xf32> to vector<8x8xf32>
    %42 = vector.extract_strided_slice %40 {offsets = [0, 8], sizes = [8, 8], strides = [1, 1]} : vector<8x32xf32> to vector<8x8xf32>
    %43 = vector.extract_strided_slice %40 {offsets = [0, 24], sizes = [8, 8], strides = [1, 1]} : vector<8x32xf32> to vector<8x8xf32>
    %44 = vector.extract_strided_slice %35 {offsets = [0, 16], sizes = [8, 8], strides = [1, 1]} : vector<8x32xf32> to vector<8x8xf32>
    %45 = math.tanh %44 : vector<8x8xf32>
    %46 = arith.mulf %42, %28 : vector<8x8xf32>
    %47 = arith.mulf %41, %45 : vector<8x8xf32>
    %48 = arith.addf %46, %47 : vector<8x8xf32>
    %49 = math.tanh %48 : vector<8x8xf32>
    %50 = arith.mulf %43, %49 : vector<8x8xf32>
    %c0_23 = arith.constant 0 : index
    %c0_24 = arith.constant 0 : index
    %51 = vector.load %arg8[%c0_23, %c0_24] : memref<8x8xf32, #tpu.memory_space<vmem>>, vector<8x8xf32>
    tpu.vector_store %arg8[%c0_23, %c0_24], %50 {strides = array<i32>} : memref<8x8xf32, #tpu.memory_space<vmem>>, vector<8x8xf32>,
    %c0_25 = arith.constant 0 : index
    %c0_26 = arith.constant 0 : index
    %52 = vector.load %arg9[%c0_25, %c0_26] : memref<8x8xf32, #tpu.memory_space<vmem>>, vector<8x8xf32>
    tpu.vector_store %arg9[%c0_25, %c0_26], %48 {strides = array<i32>} : memref<8x8xf32, #tpu.memory_space<vmem>>, vector<8x8xf32>,
    %c0_27 = arith.constant 0 : index
    %c0_28 = arith.constant 0 : index
    %53 = vector.load %arg10[%c0_27, %c0_28] : memref<8x32xf32, #tpu.memory_space<vmem>>, vector<8x32xf32>
    tpu.vector_store %arg10[%c0_27, %c0_28], %26 {strides = array<i32>} : memref<8x32xf32, #tpu.memory_space<vmem>>, vector<8x32xf32>,
    %c0_29 = arith.constant 0 : index
    %c0_30 = arith.constant 0 : index
    %54 = vector.load %arg11[%c0_29, %c0_30] : memref<8x32xf32, #tpu.memory_space<vmem>>, vector<8x32xf32>
    tpu.vector_store %arg11[%c0_29, %c0_30], %24 {strides = array<i32>} : memref<8x32xf32, #tpu.memory_space<vmem>>, vector<8x32xf32>,
    return
  }
}

</mosaic_0001>

<llo_original>
// kernel: tpu_custom_call.1
$region0: #{tpu_custom_call.1}
  #allocation0 [shape = 'u32[]', space=smem, size = 0x4, offset = 0x4, fixed_abs, tag = 'smem constant byte address 0x4 - core index']
  #allocation1 [shape = 'u32[72,128]{1,0:T(1,128)}', space=vmem, size = 0x9000, scoped, tag = 'internal scratch']
  %s0 = inlined_call_operand.vmem [shape: f32[8,16], index: 0, kind: input, shape index: {}]
  %s1 = inlined_call_operand.vmem [shape: f32[8,32], index: 1, kind: input, shape index: {}]
  %s2 = inlined_call_operand.vmem [shape: f32[8,32], index: 2, kind: input, shape index: {}]
  %s3 = inlined_call_operand.hbm [shape: f32[8,8], index: 3, kind: input, shape index: {}]
  %s4 = inlined_call_operand.hbm [shape: f32[8,8], index: 4, kind: input, shape index: {}]
  %s5 = inlined_call_operand.vmem [shape: f32[48,128], index: 5, kind: input, shape index: {}]
  %s6 = inlined_call_operand.vmem [shape: f32[40,32], index: 6, kind: input, shape index: {}]
  %s7 = inlined_call_operand.vmem [shape: f32[1,160], index: 7, kind: input, shape index: {}]
  %s8 = inlined_call_operand.hbm [shape: f32[8,8], index: 8, kind: output, shape index: {0}]
  %s9 = inlined_call_operand.hbm [shape: f32[8,8], index: 9, kind: output, shape index: {1}]
  %s10 = inlined_call_operand.hbm [shape: f32[8,32], index: 10, kind: output, shape index: {2}]
  %s11 = inlined_call_operand.hbm [shape: f32[8,32], index: 11, kind: output, shape index: {3}]
  %12 = xla_tuple %s8, %s9, %s10, %s11
  %s13 = sld [smem:[#allocation0]]
  $region74: #{tpu_custom_call.1} parent=0
    _
  %s15 = ssub.s32 1, %s13
  %s16 = scalar_select 0, %s15, %s13
  $region1: #{tpu_custom_call.1} parent=0
    #allocation2 [shape = 'u8[4096]{0}', space=vmem, size = 0x1000, scoped, tag = 'input window, operand 3, single buffered']
    #allocation3 [shape = 's32[1]{0}', space=sflag, size = 0x4, scoped, tag = 'scoped memory for tpu_custom_call.1']
    #allocation4 [shape = 's32[1]{0}', space=sflag, size = 0x4, scoped, tag = 'scoped memory for tpu_custom_call.1']
    #allocation5 [shape = 'u8[4096]{0}', space=vmem, size = 0x1000, scoped, tag = 'input window, operand 4, single buffered']
    #allocation6 [shape = 's32[1]{0}', space=sflag, size = 0x4, scoped, tag = 'scoped memory for tpu_custom_call.1']
    #allocation7 [shape = 'u8[4096]{0}', space=vmem, size = 0x1000, scoped, tag = 'output window, operand 0, single buffered']
    #allocation8 [shape = 'u8[4096]{0}', space=vmem, size = 0x1000, scoped, tag = 'output window, operand 1, single buffered']
    #allocation9 [shape = 's32[1]{0}', space=sflag, size = 0x4, scoped, tag = 'scoped memory for tpu_custom_call.1']
    #allocation10 [shape = 'u8[4096]{0}', space=vmem, size = 0x1000, scoped, tag = 'output window, operand 2, single buffered']
    #allocation11 [shape = 'u8[4096]{0}', space=vmem, size = 0x1000, scoped, tag = 'output window, operand 3, single buffered']
    #allocation12 [shape = 's32[1]{0}', space=sflag, size = 0x4, scoped, tag = 'scoped memory for tpu_custom_call.1']
    %17 = vsyncpa [#allocation3], 0
    %18 = vsyncpa [#allocation6], 0
    %19 = vsyncpa [#allocation4], 0
    %20 = vsyncpa [#allocation9], 0
    %21 = vsyncpa [#allocation12], 0
    // Predicated region
    $region2: #{tpu_custom_call.1} parent=1 // pred_check
      _
    $region3: #{tpu_custom_call.1} parent=1 // pred_check_branch
      %23 = sbr.rel (0) target = $region5
    $region4: #{tpu_custom_call.1} parent=1 // pred_region
      _
    $region5: #{tpu_custom_call.1} parent=1 // pred_fallthru
      _
    // Predicated region
    $region6: #{tpu_custom_call.1} parent=1 // pred_check
      _
    $region7: #{tpu_custom_call.1} parent=1 // pred_check_branch
      %25 = sbr.rel (0) target = $region9
    $region8: #{tpu_custom_call.1} parent=1 // pred_region
      _
    $region9: #{tpu_custom_call.1} parent=1 // pred_fallthru
      _
    // Predicated region
    $region10: #{tpu_custom_call.1} parent=1 // pred_check
      _
    $region11: #{tpu_custom_call.1} parent=1 // pred_check_branch
      %27 = sbr.rel (0) target = $region13
    $region12: #{tpu_custom_call.1} parent=1 // pred_region
      _
    $region13: #{tpu_custom_call.1} parent=1 // pred_fallthru
      _
    // Predicated region
    $region14: #{tpu_custom_call.1} parent=1 // pred_check
      _
    $region15: #{tpu_custom_call.1} parent=1 // pred_check_branch
      %29 = sbr.rel (0) target = $region17
    $region16: #{tpu_custom_call.1} parent=1 // pred_region
      %31 = vsyncadd [#allocation3], 0
      %s33 = sshll.u32 %s3, 4
      %s34 = int_to_ptr.hbm [resolvable:$true] %s33
      %s35 = sshll.u32 [#allocation2], 4
      %s36 = int_to_ptr.vmem [resolvable:$true] %s35
      %38 = dma.hbm_to_vmem [thread:$0]  %s34, 128, %s36, [#allocation3]
    $region17: #{tpu_custom_call.1} parent=1 // pred_fallthru
      _
    // Predicated region
    $region18: #{tpu_custom_call.1} parent=1 // pred_check
      _
    $region19: #{tpu_custom_call.1} parent=1 // pred_check_branch
      %40 = sbr.rel (0) target = $region21
    $region20: #{tpu_custom_call.1} parent=1 // pred_region
      %42 = vsyncadd [#allocation6], 0
      %s44 = sshll.u32 %s4, 4
      %s45 = int_to_ptr.hbm [resolvable:$true] %s44
      %s46 = sshll.u32 [#allocation5], 4
      %s47 = int_to_ptr.vmem [resolvable:$true] %s46
      %49 = dma.hbm_to_vmem [thread:$0]  %s45, 128, %s47, [#allocation6]
    $region21: #{tpu_custom_call.1} parent=1 // pred_fallthru
      _
    // Predicated region
    $region22: #{tpu_custom_call.1} parent=1 // pred_check
      _
    $region23: #{tpu_custom_call.1} parent=1 // pred_check_branch
      %51 = sbr.rel (0) target = $region25
    $region24: #{tpu_custom_call.1} parent=1 // pred_region
      _
    $region25: #{tpu_custom_call.1} parent=1 // pred_fallthru
      _
    // Predicated region
    $region26: #{tpu_custom_call.1} parent=1 // pred_check
      _
    $region27: #{tpu_custom_call.1} parent=1 // pred_check_branch
      %53 = sbr.rel (0) target = $region29
    $region28: #{tpu_custom_call.1} parent=1 // pred_region
      _
    $region29: #{tpu_custom_call.1} parent=1 // pred_fallthru
      _
    // Predicated region
    $region30: #{tpu_custom_call.1} parent=1 // pred_check
      _
    $region31: #{tpu_custom_call.1} parent=1 // pred_check_branch
      %55 = sbr.rel (0) target = $region33
    $region32: #{tpu_custom_call.1} parent=1 // pred_region
      _
    $region33: #{tpu_custom_call.1} parent=1 // pred_fallthru
      _
    // Predicated region
    $region34: #{tpu_custom_call.1} parent=1 // pred_check
      _
    $region35: #{tpu_custom_call.1} parent=1 // pred_check_branch
      %57 = sbr.rel (0) target = $region37
    $region36: #{tpu_custom_call.1} parent=1 // pred_region
      %59 = dma.done [#allocation3], 128
    $region37: #{tpu_custom_call.1} parent=1 // pred_fallthru
      _
    // Predicated region
    $region38: #{tpu_custom_call.1} parent=1 // pred_check
      _
    $region39: #{tpu_custom_call.1} parent=1 // pred_check_branch
      %61 = sbr.rel (0) target = $region41
    $region40: #{tpu_custom_call.1} parent=1 // pred_region
      %63 = dma.done [#allocation6], 128
    $region41: #{tpu_custom_call.1} parent=1 // pred_fallthru
      _
    %v64 = vld [vmem:[%s7] sm:$0x1]
    %v65 = vld [vmem:[%s7 + $0x1] sm:$0x1]
    %v66 = vld [vmem:[%s0] sm:$0xff]
    %v67 = vld [vmem:[%s1] sm:$0xff]
    %v68 = vld [vmem:[%s2] sm:$0xff]
    %v69 = vld [vmem:[%s5] sm:$0xff]
    %v70 = vld [vmem:[%s5 + $0x8] sm:$0xff]
    %v71 = vld [vmem:[%s5 + $0x10] sm:$0xff]
    %v72 = vld [vmem:[%s5 + $0x18] sm:$0xff]
    %v73 = vld [vmem:[%s5 + $0x20] sm:$0xff]
    %v74 = vld [vmem:[%s5 + $0x28] sm:$0xff]
    %vm75 = vcmask 261120
    %v77 = vsel %vm75, %v67, 0
    %79 = vmatpush.msra.mxu0 0.0
    %80 = vmatpush.msra.mxu0 0.0
    %81 = vmatpush.msra.mxu0 0.0
    %82 = vmatpush.msra.mxu0 0.0
    %83 = vmatpush.msra.mxu0 0.0
    %84 = vmatpush.msra.mxu0 0.0
    %85 = vmatpush.msra.mxu0 0.0
    %86 = vmatpush.msra.mxu0 0.0
    %87 = vmatpush.msra.mxu0 0.0
    %88 = vmatpush.msra.mxu0 0.0
    %89 = vmatpush.msra.mxu0 0.0
    %90 = vmatpush.msra.mxu0 0.0
    %91 = vmatpush.msra.mxu0 %v74
    %92 = vmatpush.msra.mxu0 %v73
    %93 = vmatpush.msra.mxu0 %v72
    %94 = vmatpush.msra.mxu0 %v71
    %95 = vmatmul.f32.gmra.mxu0 %v77
    %v96 = vpop.f32.mrf.mxu0
    %v97 = vadd.f32 0.0, %v96
    %98 = vdwg.mxu0
    %vm99 = vcmask 130048
    %v101 = vsel %vm99, %v66, 0
    %103 = vmatpush.msra.mxu0 0.0
    %104 = vmatpush.msra.mxu0 0.0
    %105 = vmatpush.msra.mxu0 0.0
    %106 = vmatpush.msra.mxu0 0.0
    %107 = vmatpush.msra.mxu0 0.0
    %108 = vmatpush.msra.mxu0 0.0
    %109 = vmatpush.msra.mxu0 0.0
    %110 = vmatpush.msra.mxu0 0.0
    %111 = vmatpush.msra.mxu0 0.0
    %112 = vmatpush.msra.mxu0 0.0
    %113 = vmatpush.msra.mxu0 0.0
    %114 = vmatpush.msra.mxu0 0.0
    %115 = vmatpush.msra.mxu0 0.0
    %116 = vmatpush.msra.mxu0 0.0
    %117 = vmatpush.msra.mxu0 %v70
    %118 = vmatpush.msra.mxu0 %v69
    %119 = vmatmul.f32.gmra.mxu0 %v101
    %v120 = vpop.f32.mrf.mxu0
    %v121 = vadd.f32 %v97, %v120
    %122 = vdwg.mxu0
    %v124 = vperm.slane %v64, 0
    %v126 = vadd.f32 %v121, %v124
    %v127 = vxor.u32 %v126, 2147483648
    %v128 = vmul.f32 %v127, 1.442695
    %v129 = vpow.pop %v128
    %v130 = vadd.f32 %v129, 1.0
    %v131 = vrcp.pop %v130
    %v132 = vmul.f32 %v130, %v131
    %v133 = vsub.f32 1.0, %v132
    %v134 = vmul.f32 %v131, %v133
    %v135 = vadd.f32 %v131, %v134
    %vm136 = vweird.f32 %v130
    %vm137 = vweird.f32 %v131
    %vm138 = vmor %vm136, %vm137
    %v139 = vsel %vm138, %v131, %v135
    %v140 = vand.u32 2147483647, %v130
    %vm141 = vcmp.eq.f32.partialorder %v140, 8.507059e+37
    %v142 = vand.u32 %v130, 2147483648
    %v143 = vor.u32 1.1754944e-38, %v142
    %v144 = vsel %vm141, %v143, %v139
    %v145 = vmul.f32 1.0, %v144
    %v146 = vtanh.pop %v126
    %148 = vrot.lane.b32.xlu0 %v68, 32
    %v149 = vpop.permute.xlu0 %148
    %v151 = vmul.f32 %v145, %v149
    %153 = vrot.lane.b32.xlu0 %v146, 64
    %v154 = vpop.permute.xlu0 %153
    %v156 = vmul.f32 %v145, %v154
    %158 = vrot.lane.b32.xlu0 %v156, 32
    %v159 = vpop.permute.xlu0 %158
    %v161 = vadd.f32 %v151, %v159
    %v162 = vtanh.pop %v161
    %164 = vrot.lane.b32.xlu0 %v162, 64
    %v165 = vpop.permute.xlu0 %164
    %v167 = vmul.f32 %v145, %v165
    %v168 = vld [vmem:[#allocation2] sm:$0xff]
    %v169 = vld [vmem:[#allocation5] sm:$0xff]
    %v170 = vld [vmem:[%s6] sm:$0xff]
    %v171 = vld [vmem:[%s6 + $0x8] sm:$0xff]
    %v172 = vld [vmem:[%s6 + $0x10] sm:$0xff]
    %v173 = vld [vmem:[%s6 + $0x18] sm:$0xff]
    %v174 = vld [vmem:[%s6 + $0x20] sm:$0xff]
    %vm175 = vcmask 64512
    %v177 = vsel %vm175, %v168, 0
    %179 = vmatpush.msra.mxu0 0.0
    %180 = vmatpush.msra.mxu0 0.0
    %181 = vmatpush.msra.mxu0 0.0
    %182 = vmatpush.msra.mxu0 0.0
    %183 = vmatpush.msra.mxu0 0.0
    %184 = vmatpush.msra.mxu0 0.0
    %185 = vmatpush.msra.mxu0 0.0
    %186 = vmatpush.msra.mxu0 0.0
    %187 = vmatpush.msra.mxu0 0.0
    %188 = vmatpush.msra.mxu0 0.0
    %189 = vmatpush.msra.mxu0 0.0
    %190 = vmatpush.msra.mxu0 0.0
    %191 = vmatpush.msra.mxu0 0.0
    %192 = vmatpush.msra.mxu0 0.0
    %193 = vmatpush.msra.mxu0 0.0
    %194 = vmatpush.msra.mxu0 %v174
    %195 = vmatmul.f32.gmra.mxu0 %v177
    %v196 = vpop.f32.mrf.mxu0
    %v197 = vadd.f32 0.0, %v196
    %198 = vdwg.mxu0
    %200 = vrot.lane.b32.xlu0 %v167, 32
    %v201 = vpop.permute.xlu0 %200
    %v202 = vsel %vm75, %v201, 0
    %204 = vmatpush.msra.mxu0 0.0
    %205 = vmatpush.msra.mxu0 0.0
    %206 = vmatpush.msra.mxu0 0.0
    %207 = vmatpush.msra.mxu0 0.0
    %208 = vmatpush.msra.mxu0 0.0
    %209 = vmatpush.msra.mxu0 0.0
    %210 = vmatpush.msra.mxu0 0.0
    %211 = vmatpush.msra.mxu0 0.0
    %212 = vmatpush.msra.mxu0 0.0
    %213 = vmatpush.msra.mxu0 0.0
    %214 = vmatpush.msra.mxu0 0.0
    %215 = vmatpush.msra.mxu0 0.0
    %216 = vmatpush.msra.mxu0 %v173
    %217 = vmatpush.msra.mxu0 %v172
    %218 = vmatpush.msra.mxu0 %v171
    %219 = vmatpush.msra.mxu0 %v170
    %220 = vmatmul.f32.gmra.mxu0 %v202
    %v221 = vpop.f32.mrf.mxu0
    %v222 = vadd.f32 %v197, %v221
    %223 = vdwg.mxu0
    %v225 = vperm.slane %v65, 0
    %v227 = vadd.f32 %v222, %v225
    %v228 = vxor.u32 %v227, 2147483648
    %v229 = vmul.f32 %v228, 1.442695
    %v230 = vpow.pop %v229
    %v231 = vadd.f32 %v230, 1.0
    %v232 = vrcp.pop %v231
    %v233 = vmul.f32 %v231, %v232
    %v234 = vsub.f32 1.0, %v233
    %v235 = vmul.f32 %v232, %v234
    %v236 = vadd.f32 %v232, %v235
    %vm237 = vweird.f32 %v231
    %vm238 = vweird.f32 %v232
    %vm239 = vmor %vm237, %vm238
    %v240 = vsel %vm239, %v232, %v236
    %v241 = vand.u32 2147483647, %v231
    %vm242 = vcmp.eq.f32.partialorder %v241, 8.507059e+37
    %v243 = vand.u32 %v231, 2147483648
    %v244 = vor.u32 1.1754944e-38, %v243
    %v245 = vsel %vm242, %v244, %v240
    %v246 = vmul.f32 1.0, %v245
    %v247 = vtanh.pop %v227
    %249 = vrot.lane.b32.xlu0 %v169, 8
    %v250 = vpop.permute.xlu0 %249
    %v252 = vmul.f32 %v246, %v250
    %254 = vrot.lane.b32.xlu0 %v247, 112
    %v255 = vpop.permute.xlu0 %254
    %v257 = vmul.f32 %v246, %v255
    %259 = vrot.lane.b32.xlu0 %v257, 8
    %v260 = vpop.permute.xlu0 %259
    %v262 = vadd.f32 %v252, %v260
    %v263 = vtanh.pop %v262
    %265 = vrot.lane.b32.xlu0 %v263, 16
    %v266 = vpop.permute.xlu0 %265
    %v268 = vmul.f32 %v246, %v266
    %270 = vrot.lane.b32.xlu0 %v268, 104
    %v271 = vpop.permute.xlu0 %270
    %273 = vst.msk [vmem:[#allocation7] sm:$0xff] %vm175, %v271
    %275 = vrot.lane.b32.xlu0 %v262, 120
    %v276 = vpop.permute.xlu0 %275
    %278 = vst.msk [vmem:[#allocation8] sm:$0xff] %vm175, %v276
    %280 = vst.msk [vmem:[#allocation10] sm:$0xff] %vm75, %v201
    %282 = vrot.lane.b32.xlu0 %v161, 96
    %v283 = vpop.permute.xlu0 %282
    %285 = vst.msk [vmem:[#allocation11] sm:$0xff] %vm75, %v283
    // Predicated region
    $region42: #{tpu_custom_call.1} parent=1 // pred_check
      _
    $region43: #{tpu_custom_call.1} parent=1 // pred_check_branch
      %287 = sbr.rel (0) target = $region45
    $region44: #{tpu_custom_call.1} parent=1 // pred_region
      %289 = vsyncadd [#allocation4], 0
      %s291 = sshll.u32 [#allocation7], 4
      %s292 = int_to_ptr.vmem [resolvable:$true] %s291
      %s293 = sshll.u32 %s8, 4
      %s294 = int_to_ptr.hbm [resolvable:$true] %s293
      %296 = dma.vmem_to_hbm [thread:$0]  %s292, 128, %s294, [#allocation4]
    $region45: #{tpu_custom_call.1} parent=1 // pred_fallthru
      _
    // Predicated region
    $region46: #{tpu_custom_call.1} parent=1 // pred_check
      _
    $region47: #{tpu_custom_call.1} parent=1 // pred_check_branch
      %298 = sbr.rel (0) target = $region49
    $region48: #{tpu_custom_call.1} parent=1 // pred_region
      %300 = vsyncadd [#allocation9], 0
      %s302 = sshll.u32 [#allocation8], 4
      %s303 = int_to_ptr.vmem [resolvable:$true] %s302
      %s304 = sshll.u32 %s9, 4
      %s305 = int_to_ptr.hbm [resolvable:$true] %s304
      %307 = dma.vmem_to_hbm [thread:$0]  %s303, 128, %s305, [#allocation9]
    $region49: #{tpu_custom_call.1} parent=1 // pred_fallthru
      _
    // Predicated region
    $region50: #{tpu_custom_call.1} parent=1 // pred_check
      _
    $region51: #{tpu_custom_call.1} parent=1 // pred_check_branch
      %309 = sbr.rel (0) target = $region53
    $region52: #{tpu_custom_call.1} parent=1 // pred_region
      %311 = vsyncadd [#allocation9], 0
      %s313 = sshll.u32 [#allocation10], 4
      %s314 = int_to_ptr.vmem [resolvable:$true] %s313
      %s315 = sshll.u32 %s10, 4
      %s316 = int_to_ptr.hbm [resolvable:$true] %s315
      %318 = dma.vmem_to_hbm [thread:$0]  %s314, 128, %s316, [#allocation9]
    $region53: #{tpu_custom_call.1} parent=1 // pred_fallthru
      _
    // Predicated region
    $region54: #{tpu_custom_call.1} parent=1 // pred_check
      _
    $region55: #{tpu_custom_call.1} parent=1 // pred_check_branch
      %320 = sbr.rel (0) target = $region57
    $region56: #{tpu_custom_call.1} parent=1 // pred_region
      %322 = vsyncadd [#allocation12], 0
      %s324 = sshll.u32 [#allocation11], 4
      %s325 = int_to_ptr.vmem [resolvable:$true] %s324
      %s326 = sshll.u32 %s11, 4
      %s327 = int_to_ptr.hbm [resolvable:$true] %s326
      %329 = dma.vmem_to_hbm [thread:$0]  %s325, 128, %s327, [#allocation12]
    $region57: #{tpu_custom_call.1} parent=1 // pred_fallthru
      _
    // Predicated region
    $region58: #{tpu_custom_call.1} parent=1 // pred_check
      _
    $region59: #{tpu_custom_call.1} parent=1 // pred_check_branch
      %331 = sbr.rel (0) target = $region61
    $region60: #{tpu_custom_call.1} parent=1 // pred_region
      %333 = dma.done [#allocation4], 128
    $region61: #{tpu_custom_call.1} parent=1 // pred_fallthru
      _
    // Predicated region
    $region62: #{tpu_custom_call.1} parent=1 // pred_check
      _
    $region63: #{tpu_custom_call.1} parent=1 // pred_check_branch
      %335 = sbr.rel (0) target = $region65
    $region64: #{tpu_custom_call.1} parent=1 // pred_region
      %337 = dma.done [#allocation9], 128
    $region65: #{tpu_custom_call.1} parent=1 // pred_fallthru
      _
    // Predicated region
    $region66: #{tpu_custom_call.1} parent=1 // pred_check
      _
    $region67: #{tpu_custom_call.1} parent=1 // pred_check_branch
      %339 = sbr.rel (0) target = $region69
    $region68: #{tpu_custom_call.1} parent=1 // pred_region
      %341 = dma.done [#allocation9], 128
    $region69: #{tpu_custom_call.1} parent=1 // pred_fallthru
      _
    // Predicated region
    $region70: #{tpu_custom_call.1} parent=1 // pred_check
      _
    $region71: #{tpu_custom_call.1} parent=1 // pred_check_branch
      %343 = sbr.rel (0) target = $region73
    $region72: #{tpu_custom_call.1} parent=1 // pred_region
      %345 = dma.done [#allocation12], 128
    $region73: #{tpu_custom_call.1} parent=1 // pred_fallthru
      _
    %346 = vsyncpa [#allocation3], 1
    %347 = vsyncpa [#allocation6], 1
    %348 = vsyncpa [#allocation4], 1
    %349 = vsyncpa [#allocation9], 1
    %350 = vsyncpa [#allocation12], 1

</llo_original>
